<compile_context>
chip_gen: v6e
topology: v6e:2x2x1
jax: 0.10.0
libtpu: 0.0.40
codegen_flags: <defaults>
</compile_context>

<pallas_src>
import functools

import jax
import jax.numpy as jnp
from jax.experimental import pallas as pl
from jax.experimental.pallas import tpu as pltpu


def _ce_label_smooth_kernel(x_ref, t_ref, o_ref, *,
                            epsilon: float, num_classes: int,
                            batch: int, tile_b: int, ragged: bool):
    # (TILE_B, C) logits tile, cast to f32 in-kernel (inputs may be bf16).
    x = x_ref[...].astype(jnp.float32)

    # Numerically stable log-softmax pieces (per row, class axis = lanes).
    m = jnp.max(x, axis=1, keepdims=True)
    shifted = x - m                                                    # <= 0
    lse = jnp.log(jnp.sum(jnp.exp(shifted), axis=1, keepdims=True))    # (TILE_B,1)

    # Fused label-smoothing weights: w_j = (1-eps)*[j==t] + eps/C, sum_j w_j = 1
    #   row_loss = -sum_j w_j*(shifted_j - lse) = lse - sum_j w_j*shifted_j
    low = epsilon / num_classes
    high = (1.0 - epsilon) + low
    class_ids = jax.lax.broadcasted_iota(jnp.int32, (tile_b, num_classes), 1)
    w = jnp.where(class_ids == t_ref[...], jnp.float32(high), jnp.float32(low))
    row_loss = lse - jnp.sum(w * shifted, axis=1, keepdims=True)       # (TILE_B,1)

    if ragged:
        # Zero rows past the true batch size in the last tile.  Padded-row
        # garbage is harmless up to here because every reduction is per-row.
        row_ids = (pl.program_id(0) * tile_b
                   + jax.lax.broadcasted_iota(jnp.int32, (tile_b, 1), 0))
        row_loss = jnp.where(row_ids < batch, row_loss, 0.0)

    o_ref[...] = row_loss


def _vmem_limit_bytes() -> int:
    """Per-generation scoped-VMEM budget for this kernel."""
    phys = 64 * 1024 * 1024              # conservative fallback (v7x physical)
    try:
        info = pltpu.get_tpu_info()
        phys = int(getattr(info, "vmem_capacity_bytes", phys))
    except Exception:
        pass
    # 64 MiB on the 128 MiB chips (v5e/v6e), 48 MiB on v7x's 64 MiB VMEM.
    return min(64 * 1024 * 1024, (3 * phys) // 4)


def _choose_tile_b(batch: int, num_classes: int, itemsize: int,
                   vmem_limit_bytes: int, buffers: int = 2) -> int:
    # Budget per row: `buffers` pipelined input copies in the input dtype plus
    # ~5 full-width f32 intermediates (f32 cast, shifted, exp(shifted),
    # class-id iota, smoothing weights).  Use ~60% of the scoped limit.
    budget = (6 * vmem_limit_bytes) // 10
    bytes_per_row = num_classes * (buffers * itemsize + 5 * 4) + 64
    rows = budget // max(1, bytes_per_row)
    rows = (rows // 8) * 8
    rows = max(8, min(1024, rows))
    if batch <= rows:
        return batch      # single tile; block dim == full array dim is legal
    return rows           # multiple of 8 -> legal block for any batch size


def cross_entropy_label_smooth(inputs, targets, epsilon: float = 0.1, *,
                               tile_b=None, logits_buffers: int = 2):
    """Label-smoothed cross entropy.

    inputs : (B, C) float logits -- keep them bf16 end-to-end if you have bf16;
             the kernel casts per tile, and bf16 halves the HBM bytes streamed.
    targets: (B,) int class indices.
    """
    b, c = inputs.shape
    targets_2d = targets.astype(jnp.int32).reshape(b, 1)

    vmem_limit = _vmem_limit_bytes()
    if tile_b is None:
        tile_b = _choose_tile_b(b, c, jnp.dtype(inputs.dtype).itemsize,
                                vmem_limit, logits_buffers)
    tile_b = min(tile_b, b)
    n_tiles = pl.cdiv(b, tile_b)
    ragged = (b % tile_b) != 0

    kernel = functools.partial(
        _ce_label_smooth_kernel,
        epsilon=float(epsilon), num_classes=c, batch=b,
        tile_b=tile_b, ragged=ragged)

    # Optional deeper buffering on the logits stream (sweep 2 vs 3 when tiles
    # are small and numerous); default 2 uses the standard double buffer.
    logits_spec_kwargs = {}
    if logits_buffers != 2:
        logits_spec_kwargs["pipeline_mode"] = pl.Buffered(logits_buffers)

    row_losses = pl.pallas_call(
        kernel,
        out_shape=jax.ShapeDtypeStruct((n_tiles * tile_b, 1), jnp.float32),
        grid=(n_tiles,),
        in_specs=[
            pl.BlockSpec((tile_b, c), lambda i: (i, 0),
                         **logits_spec_kwargs),                  # logits tile
            pl.BlockSpec((tile_b, 1), lambda i: (i, 0)),         # target ids
        ],
        out_specs=pl.BlockSpec((tile_b, 1), lambda i: (i, 0)),   # row losses
        compiler_params=pltpu.CompilerParams(
            dimension_semantics=("parallel",),   # tiles independent -> both TCs
            vmem_limit_bytes=vmem_limit,
        ),
    )(inputs, targets_2d)

    # Tiny final reduce in the wrapper: sum over B (padded rows are zero),
    # then the mean-over-batch scaling.
    return jnp.sum(row_losses) * (1.0 / b)


def _reference(inputs, targets, epsilon=0.1):
    b, c = inputs.shape
    log_probs = jax.nn.log_softmax(inputs.astype(jnp.float32), axis=1)
    onehot = jax.nn.one_hot(targets, c, dtype=jnp.float32)
    smoothed = (1.0 - epsilon) * onehot + epsilon / c
    return jnp.sum(jnp.mean(-smoothed * log_probs, axis=0))


if __name__ == "__main__":
    key = jax.random.PRNGKey(0)
    k_x, k_t, k_x2, k_t2 = jax.random.split(key, 4)

    # Small shapes consistent with the module's forward: (batch, num_classes).
    batch, num_classes = 8, 32
    x = jax.random.normal(k_x, (batch, num_classes), dtype=jnp.float32)
    t = jax.random.randint(k_t, (batch,), 0, num_classes, dtype=jnp.int32)

    loss = cross_entropy_label_smooth(x, t, epsilon=0.1)
    jax.block_until_ready(loss)
    ref = _reference(x, t, epsilon=0.1)
    assert jnp.allclose(loss, ref, atol=1e-4, rtol=1e-5), (loss, ref)

    # Exercise the multi-tile parallel grid, the ragged-final-tile masking
    # path, and the bf16 logits path.
    b2, c2 = 30, 128
    x2 = jax.random.normal(k_x2, (b2, c2)).astype(jnp.bfloat16)
    t2 = jax.random.randint(k_t2, (b2,), 0, c2, dtype=jnp.int32)
    loss2 = cross_entropy_label_smooth(x2, t2, epsilon=0.1, tile_b=8)
    jax.block_until_ready(loss2)
    ref2 = _reference(x2, t2, epsilon=0.1)
    assert jnp.allclose(loss2, ref2, atol=1e-3, rtol=1e-3), (loss2, ref2)

    print("KERNEL_OK")
</pallas_src>

<mosaic_0001>
module attributes {stable_mosaic.version = 11 : i64} {
  func.func @_ce_label_smooth_kernel(%arg0: i32, %arg1: memref<8x32xf32, #tpu.memory_space<vmem>>, %arg2: memref<8x1xi32, #tpu.memory_space<vmem>>, %arg3: memref<8x1xf32, #tpu.memory_space<vmem>>) attributes {dimension_semantics = [#tpu.dimension_semantics<parallel>], iteration_bounds = array<i64: 1>, scalar_prefetch = 0 : i64, scratch_operands = 0 : i64, tpu.core_type = #tpu.core_type<tc>, window_params = [{transform_indices = @transform_0, window_bounds = array<i64: 8, 32>}, {transform_indices = @transform_1, window_bounds = array<i64: 8, 1>}, {transform_indices = @transform_2, window_bounds = array<i64: 8, 1>}]} {
    %c0 = arith.constant 0 : index
    %c0_0 = arith.constant 0 : index
    %0 = vector.load %arg1[%c0, %c0_0] : memref<8x32xf32, #tpu.memory_space<vmem>>, vector<8x32xf32>
    %cst = arith.constant dense<0xFF800000> : vector<8xf32>
    %1 = vector.multi_reduction <maximumf>, %0, %cst [1] : vector<8x32xf32> to vector<8xf32>
    %2 = vector.shape_cast %1 : vector<8xf32> to vector<8x1xf32>
    %3 = vector.broadcast %2 : vector<8x1xf32> to vector<8x32xf32>
    %4 = arith.subf %0, %3 : vector<8x32xf32>
    %5 = math.exp %4 : vector<8x32xf32>
    %cst_1 = arith.constant dense<0.000000e+00> : vector<8xf32>
    %6 = vector.multi_reduction <add>, %5, %cst_1 [1] : vector<8x32xf32> to vector<8xf32>
    %7 = vector.shape_cast %6 : vector<8xf32> to vector<8x1xf32>
    %8 = math.log %7 : vector<8x1xf32>
    %9 = tpu.iota {dimensions = array<i32: 1>} : vector<8x32xi32>
    %c0_2 = arith.constant 0 : index
    %c0_3 = arith.constant 0 : index
    %10 = vector.load %arg2[%c0_2, %c0_3] : memref<8x1xi32, #tpu.memory_space<vmem>>, vector<8x1xi32>
    %11 = vector.broadcast %10 : vector<8x1xi32> to vector<8x32xi32>
    %12 = arith.cmpi eq, %9, %11 : vector<8x32xi32>
    %cst_4 = arith.constant 0.903124988 : f32
    %cst_5 = arith.constant 3.125000e-03 : f32
    %13 = vector.broadcast %cst_4 : f32 to vector<8x32xf32>
    %14 = vector.broadcast %cst_5 : f32 to vector<8x32xf32>
    %15 = arith.select %12, %13, %14 : vector<8x32xi1>, vector<8x32xf32>
    %16 = arith.mulf %15, %4 : vector<8x32xf32>
    %cst_6 = arith.constant dense<0.000000e+00> : vector<8xf32>
    %17 = vector.multi_reduction <add>, %16, %cst_6 [1] : vector<8x32xf32> to vector<8xf32>
    %18 = vector.shape_cast %17 : vector<8xf32> to vector<8x1xf32>
    %19 = arith.subf %8, %18 : vector<8x1xf32>
    %c0_7 = arith.constant 0 : index
    %c0_8 = arith.constant 0 : index
    %20 = vector.load %arg3[%c0_7, %c0_8] : memref<8x1xf32, #tpu.memory_space<vmem>>, vector<8x1xf32>
    tpu.vector_store %arg3[%c0_7, %c0_8], %19 {strides = array<i32>} : memref<8x1xf32, #tpu.memory_space<vmem>>, vector<8x1xf32>,
    return
  }
  func.func @transform_0(%arg0: i32) -> (i32, i32) {
    %c0_i32 = arith.constant 0 : i32
    %c0_i32_0 = arith.constant 0 : i32
    return %arg0, %c0_i32 : i32, i32
  }
  func.func @transform_1(%arg0: i32) -> (i32, i32) {
    %c0_i32 = arith.constant 0 : i32
    %c0_i32_0 = arith.constant 0 : i32
    return %arg0, %c0_i32 : i32, i32
  }
  func.func @transform_2(%arg0: i32) -> (i32, i32) {
    %c0_i32 = arith.constant 0 : i32
    %c0_i32_0 = arith.constant 0 : i32
    return %arg0, %c0_i32 : i32, i32
  }
}

</mosaic_0001>

<llo_original>
// kernel: tpu_custom_call.1
$region0: #{tpu_custom_call.1}
  #allocation0 [shape = 'u32[]', space=smem, size = 0x4, offset = 0x4, fixed_abs, tag = 'smem constant byte address 0x4 - core index']
  #allocation1 [shape = 'u32[144,128]{1,0:T(1,128)}', space=vmem, size = 0x12000, scoped, tag = 'internal scratch']
  %s0 = inlined_call_operand.vmem [shape: f32[8,32], index: 0, kind: input, shape index: {}]
  %s1 = inlined_call_operand.vmem [shape: s32[8,1], index: 1, kind: input, shape index: {}]
  %s2 = inlined_call_operand.vmem [shape: f32[8,1], index: 2, kind: output, shape index: {}]
  %s3 = sld [smem:[#allocation0]]
  $region18: #{tpu_custom_call.1} parent=0
    _
  %s5 = ssub.s32 1, %s3
  %s6 = scalar_select 0, %s5, %s3
  // Predicated region
  $region2: #{tpu_custom_call.1} parent=0 // pred_check
    _
  $region3: #{tpu_custom_call.1} parent=0 // pred_check_branch
    %8 = sbr.rel (0) target = $region5
  $region4: #{tpu_custom_call.1} parent=0 // pred_region
    _
  $region5: #{tpu_custom_call.1} parent=0 // pred_fallthru
    _
  // Predicated region
  $region6: #{tpu_custom_call.1} parent=0 // pred_check
    _
  $region7: #{tpu_custom_call.1} parent=0 // pred_check_branch
    %10 = sbr.rel (0) target = $region9
  $region8: #{tpu_custom_call.1} parent=0 // pred_region
    _
  $region9: #{tpu_custom_call.1} parent=0 // pred_fallthru
    _
  %v11 = vld [vmem:[%s0] sm:$0xff]
  %vm12 = vcmask 261120
  %v13 = vsel %vm12, %v11, -inf
  %14 = vmax.xlane.f32.xlu0 %v13
  %v15 = vpop.xlane.xlu0 %14
  %v16 = vsub.f32 %v11, %v15
  %v17 = vmul.f32 %v16, 1.442695
  %v18 = vpow.pop %v17
  %v19 = vsel %vm12, %v18, 0.0
  %20 = vadd.xlane.f32.xlu0 %v19
  %v21 = vpop.xlane.xlu0 %20
  %v22 = vlog2.pop %v21
  %v23 = vmul.f32 %v22, 0.6931472
  %v24 = vlaneseq
  %v25 = vand.u32 %v24, 127
  %v26 = vld [vmem:[%s1] sm:$0xff]
  %27 = vset.pattern.permute.xlu0 0
  %28 = vperm.xlu0 %27, %v26
  %v29 = vpop.permute.xlu0 %28
  %vm30 = vcmp.eq.s32.totalorder %v25, %v29
  %v31 = vsel %vm30, 0.903125, 0.003125
  %v32 = vmul.f32 %v31, %v16
  %v33 = vsel %vm12, %v32, 0.0
  %34 = vadd.xlane.f32.xlu0 %v33
  %v35 = vpop.xlane.xlu0 %34
  %v36 = vsub.f32 %v23, %v35
  %vm37 = vcmask 7168
  %38 = vst.msk [vmem:[%s2] sm:$0xff] %vm37, %v36
  // Predicated region
  $region10: #{tpu_custom_call.1} parent=0 // pred_check
    _
  $region11: #{tpu_custom_call.1} parent=0 // pred_check_branch
    %40 = sbr.rel (0) target = $region13
  $region12: #{tpu_custom_call.1} parent=0 // pred_region
    _
  $region13: #{tpu_custom_call.1} parent=0 // pred_fallthru
    _
  // Predicated region
  $region14: #{tpu_custom_call.1} parent=0 // pred_check
    _
  $region15: #{tpu_custom_call.1} parent=0 // pred_check_branch
    %42 = sbr.rel (0) target = $region17
  $region16: #{tpu_custom_call.1} parent=0 // pred_region
    _
  $region17: #{tpu_custom_call.1} parent=0 // pred_fallthru
    _

</llo_original>
